<compile_context>
chip_gen: v5e
topology: v5e:2x2
jax: 0.10.0
libtpu: 0.0.40
codegen_flags: <defaults>
</compile_context>

<pallas_src>
import numpy as np
import jax
import jax.numpy as jnp
from jax.experimental import pallas as pl
from jax.experimental.pallas import tpu as pltpu

_MXU_DTYPE = jnp.bfloat16   # MXU-native; pixel/label integers <= 255 exact in bf16.


# -----------------------------------------------------------------------------
# Interpolation weight matrices (host-side parameter setup, numpy float64)
# -----------------------------------------------------------------------------
def bilinear_aa_matrix(in_size: int, out_size: int) -> np.ndarray:
    """(out_size, in_size) weights matching torchvision bilinear + antialias."""
    scale = in_size / out_size
    support_scale = max(scale, 1.0)
    support = 1.0 * support_scale                      # triangle filter support
    W = np.zeros((out_size, in_size), dtype=np.float64)
    for i in range(out_size):
        center = (i + 0.5) * scale
        xmin = max(int(center - support + 0.5), 0)
        xmax = min(int(center + support + 0.5), in_size)
        ws = []
        for j in range(xmin, xmax):
            x = (j - center + 0.5) / support_scale
            ws.append(max(0.0, 1.0 - abs(x)))
        s = sum(ws)
        if s > 0:
            for k, j in enumerate(range(xmin, xmax)):
                W[i, j] = ws[k] / s
    return W


def nearest_matrix(in_size: int, out_size: int) -> np.ndarray:
    """(out_size, in_size) one-hot matrix matching PyTorch 'nearest' interpolate."""
    W = np.zeros((out_size, in_size), dtype=np.float64)
    for i in range(out_size):
        src = min(int(i * in_size / out_size), in_size - 1)
        W[i, src] = 1.0
    return W


def resize_output_size(h: int, w: int, size: int):
    """torchvision.Resize(int) semantics: smaller edge -> size."""
    if w <= h:
        ow = size
        oh = int(size * h / w)
    else:
        oh = size
        ow = int(size * w / h)
    return oh, ow


def build_composed_weights(H, W, Hs, Ws, test_resolution):
    """Compose resize + crop-or-pad stages into one (A_h, A_w) per path (float64)."""
    oh, ow = resize_output_size(H, W, test_resolution)
    soh, sow = resize_output_size(Hs, Ws, test_resolution)
    assert (oh, ow) == (soh, sow), "image/segmap must resize to the same shape"

    Ah_img = bilinear_aa_matrix(H, oh)          # (oh, H)
    Aw_img = bilinear_aa_matrix(W, ow)          # (ow, W)
    Nh = nearest_matrix(Hs, soh)                # (oh, Hs)
    Nw = nearest_matrix(Ws, sow)                # (ow, Ws)

    h, w = oh, ow
    if h > w:
        # pad width by p zeros each side, then bilinear-AA resize to (w, w).
        # Zero-padded columns contribute nothing -> slice the pad out of Aw2.
        p = (h - w) // 2
        Ah2 = bilinear_aa_matrix(h, w)                        # (w, h)
        Aw2 = bilinear_aa_matrix(w + 2 * p, w)[:, p:p + w]    # (w, w)
        s = w
    else:
        # pure center crop along width: row identity / column selection.
        p = (w - h) // 2
        Ah2 = np.eye(h, dtype=np.float64)                     # (h, h)
        Aw2 = np.zeros((h, w), dtype=np.float64)
        Aw2[np.arange(h), p + np.arange(h)] = 1.0             # (h, w)
        s = h

    AhI = Ah2 @ Ah_img       # (s, H)
    AwI = Aw2 @ Aw_img       # (s, W)
    AhS = Ah2 @ Nh           # (s, Hs)
    AwS = Aw2 @ Nw           # (s, Ws)
    return s, AhI, AwI, AhS, AwS


def _pick_w_tile(H, W, block_bytes_target=4 << 20):
    """W-tile: multiple of 128 that evenly divides W, sized so the streamed
    f32 image block (3H, TW) is ~block_bytes_target.  Falls back to the full
    width (single tile) for small / awkward sizes."""
    full_bytes = 3 * H * W * 4
    if full_bytes <= block_bytes_target or W % 128 != 0:
        return W
    tw_target = max(128, (block_bytes_target // (3 * H * 4)) // 128 * 128)
    cands = [t for t in range(128, W + 1, 128)
             if W % t == 0 and t <= max(tw_target, 128)]
    if not cands:
        return W
    return max(cands)


# -----------------------------------------------------------------------------
# Pallas kernel: streamed W contraction + finalize
# -----------------------------------------------------------------------------
def _fused_transform_kernel(img_ref, seg_ref, ahi_ref, awit_ref, ahs_ref,
                            awst_ref, img_out_ref, seg_out_ref, acc_ref):
    kw = pl.program_id(0)

    @pl.when(kw == 0)
    def _():
        acc_ref[...] = jnp.zeros_like(acc_ref)

    # Stream one W tile: cast f32 pixels -> bf16 on the VPU (hidden under
    # DMA/MXU) and contract the W axis of all 3 channels with one MXU matmul.
    img_blk = img_ref[...].astype(_MXU_DTYPE)                       # (3H, TW)
    acc_ref[...] += jnp.dot(img_blk, awit_ref[...],
                            preferred_element_type=jnp.float32)     # (3H, s)

    @pl.when(kw == pl.num_programs(0) - 1)
    def _():
        s, H = ahi_ref.shape
        ahi = ahi_ref[...]                                          # f32 (s, H)
        # H-contraction kept in f32 (tiny fraction of total FLOPs).
        for c in range(3):                                          # unrolled
            y = jnp.dot(ahi, acc_ref[c * H:(c + 1) * H, :],
                        preferred_element_type=jnp.float32)         # (s, s)
            # 1/127.5 is folded into ahi; only the "-1" bias remains.
            img_out_ref[c, :, :] = y - 1.0

        # Segmap path (nearest resize composed with crop-or-pad), done once.
        ts = jnp.dot(seg_ref[...].astype(_MXU_DTYPE), awst_ref[...],
                     preferred_element_type=jnp.float32)            # (Hs, s)
        seg_out_ref[...] = jnp.dot(ahs_ref[...], ts,
                                   preferred_element_type=jnp.float32)


# -----------------------------------------------------------------------------
# Full forward pass
# -----------------------------------------------------------------------------
def test_transform_with_segmap(image, segmap, test_resolution: int):
    """image: (3, H, W) f32 in [0, 255]; segmap: (Hs, Ws) f32 labels."""
    C, H, W = image.shape
    assert C == 3
    Hs, Ws = segmap.shape

    s, AhI, AwI, AhS, AwS = build_composed_weights(H, W, Hs, Ws, test_resolution)

    # Kernel operands: the big W-contraction weights are bf16 (MXU-native);
    # the small H-contraction weights stay f32.  1/127.5 folded into ahi.
    ahi = jnp.asarray(AhI / 127.5, jnp.float32)             # (s, H)
    awit = jnp.asarray(AwI.T, _MXU_DTYPE)                   # (W, s)
    ahs = jnp.asarray(AhS, jnp.float32)                     # (s, Hs)
    awst = jnp.asarray(AwS.T, _MXU_DTYPE)                   # (Ws, s)

    # f32 image passed straight through (no wrapper cast pass); the reshape of
    # a contiguous (3, H, W) -> (3H, W) is layout-free.
    img2d = image.astype(jnp.float32).reshape(3 * H, W)
    seg2d = segmap.astype(jnp.float32)

    TW = _pick_w_tile(H, W)
    nkw = W // TW

    # --- VMEM budget (double-buffered blocks + scratch + intermediates) -----
    in_blk = (3 * H * TW * 4) + (TW * s * 2) + (Hs * Ws * 4) \
             + (s * H * 4) + (s * Hs * 4) + (Ws * s * 2)
    out_blk = 3 * s * s * 4 + s * s * 4
    scratch = 3 * H * s * 4
    interm = 3 * H * s * 4 + 3 * H * TW * 2 + 4 * s * s * 4
    vmem_need = 2 * (in_blk + out_blk) + scratch + interm

    cp_kwargs = dict(dimension_semantics=("arbitrary",))
    try:
        phys_vmem = int(pltpu.get_tpu_info().vmem_capacity_bytes)
    except Exception:
        phys_vmem = 64 * 1024 * 1024        # v7x per-TC size: safest assumption
    cap = phys_vmem * 3 // 4                # never request close to physical
    default_scoped = 16 * 1024 * 1024       # v5e default (v6e/v7x: 32 MiB)
    if vmem_need > default_scoped:
        cp_kwargs["vmem_limit_bytes"] = int(min(vmem_need + (4 << 20), cap))

    img_out, seg_out = pl.pallas_call(
        _fused_transform_kernel,
        out_shape=(jax.ShapeDtypeStruct((3, s, s), jnp.float32),
                   jax.ShapeDtypeStruct((s, s), jnp.float32)),
        grid=(nkw,),
        in_specs=[
            pl.BlockSpec((3 * H, TW), lambda k: (0, k)),     # image: streamed W tiles
            pl.BlockSpec((Hs, Ws), lambda k: (0, 0)),        # segmap: resident
            pl.BlockSpec((s, H), lambda k: (0, 0)),          # ahi: resident
            pl.BlockSpec((TW, s), lambda k: (k, 0)),         # awit: streamed W tiles
            pl.BlockSpec((s, Hs), lambda k: (0, 0)),         # ahs: resident
            pl.BlockSpec((Ws, s), lambda k: (0, 0)),         # awst: resident
        ],
        out_specs=(pl.BlockSpec((3, s, s), lambda k: (0, 0, 0)),
                   pl.BlockSpec((s, s), lambda k: (0, 0))),
        scratch_shapes=[pltpu.VMEM((3 * H, s), jnp.float32)],
        compiler_params=pltpu.CompilerParams(**cp_kwargs),
    )(img2d, seg2d, ahi, awit, ahs, awst)

    return img_out, seg_out   # (3, s, s) in [-1, 1], (s, s) labels


# -----------------------------------------------------------------------------
# Staged float64 numpy reference (mirrors the PyTorch module, minus uint8 rounding)
# -----------------------------------------------------------------------------
def _reference_numpy(image, segmap, test_resolution):
    img = np.asarray(image, np.float64)
    seg = np.asarray(segmap, np.float64)
    _, H, W = img.shape
    oh, ow = resize_output_size(H, W, test_resolution)
    img_r = np.einsum('oh,chw,pw->cop',
                      bilinear_aa_matrix(H, oh), img, bilinear_aa_matrix(W, ow))
    Hs, Ws = seg.shape
    soh, sow = resize_output_size(Hs, Ws, test_resolution)
    seg_r = np.einsum('oh,hw,pw->op',
                      nearest_matrix(Hs, soh), seg, nearest_matrix(Ws, sow))
    x = np.concatenate([img_r, seg_r[None]], axis=0)
    h, w = oh, ow
    if h > w:
        p = (h - w) // 2
        xp = np.pad(x, ((0, 0), (0, 0), (p, p)))
        x = np.einsum('oh,chw,pw->cop',
                      bilinear_aa_matrix(h, w), xp, bilinear_aa_matrix(w + 2 * p, w))
    else:
        p = (w - h) // 2
        x = x[:, :, p:p + h]
    return x[:3] / 127.5 - 1.0, x[3]


# -----------------------------------------------------------------------------
if __name__ == "__main__":
    key = jax.random.PRNGKey(0)
    k1, k2 = jax.random.split(key)

    H, W = 16, 12
    test_resolution = 8

    image = (jax.random.uniform(k1, (3, H, W)) * 255.0).astype(jnp.float32)
    segmap = jax.random.randint(k2, (H, W), 0, 6).astype(jnp.float32)

    img_out, seg_out = test_transform_with_segmap(image, segmap, test_resolution)
    jax.block_until_ready((img_out, seg_out))

    assert img_out.shape == (3, test_resolution, test_resolution), img_out.shape
    assert seg_out.shape == (test_resolution, test_resolution), seg_out.shape
    assert img_out.dtype == jnp.float32 and seg_out.dtype == jnp.float32

    # Sanity check the composed/fused kernel against the staged reference
    # (loose tolerance: bf16 W-contraction vs float64 reference).
    ref_img, ref_seg = _reference_numpy(image, segmap, test_resolution)
    np.testing.assert_allclose(np.asarray(img_out), ref_img, atol=0.1)
    np.testing.assert_allclose(np.asarray(seg_out), ref_seg, atol=0.1)

    print("KERNEL_OK")
</pallas_src>

<mosaic_0001>
module attributes {stable_mosaic.version = 11 : i64} {
  func.func @_fused_transform_kernel(%arg0: i32, %arg1: memref<48x12xf32, #tpu.memory_space<vmem>>, %arg2: memref<16x12xf32, #tpu.memory_space<vmem>>, %arg3: memref<8x16xf32, #tpu.memory_space<vmem>>, %arg4: memref<12x8xbf16, #tpu.memory_space<vmem>>, %arg5: memref<8x16xf32, #tpu.memory_space<vmem>>, %arg6: memref<12x8xbf16, #tpu.memory_space<vmem>>, %arg7: memref<3x8x8xf32, #tpu.memory_space<vmem>>, %arg8: memref<8x8xf32, #tpu.memory_space<vmem>>, %arg9: memref<48x8xf32, #tpu.memory_space<vmem>>) attributes {dimension_semantics = [#tpu.dimension_semantics<arbitrary>], iteration_bounds = array<i64: 1>, scalar_prefetch = 0 : i64, scratch_operands = 1 : i64, tpu.core_type = #tpu.core_type<tc>, window_params = [{transform_indices = @transform_0, window_bounds = array<i64: 48, 12>}, {pipeline_mode = #tpu.pipeline_mode<synchronous>, transform_indices = @transform_1, window_bounds = array<i64: 16, 12>}, {pipeline_mode = #tpu.pipeline_mode<synchronous>, transform_indices = @transform_2, window_bounds = array<i64: 8, 16>}, {transform_indices = @transform_3, window_bounds = array<i64: 12, 8>}, {pipeline_mode = #tpu.pipeline_mode<synchronous>, transform_indices = @transform_4, window_bounds = array<i64: 8, 16>}, {pipeline_mode = #tpu.pipeline_mode<synchronous>, transform_indices = @transform_5, window_bounds = array<i64: 12, 8>}, {pipeline_mode = #tpu.pipeline_mode<synchronous>, transform_indices = @transform_6, window_bounds = array<i64: 3, 8, 8>}, {pipeline_mode = #tpu.pipeline_mode<synchronous>, transform_indices = @transform_7, window_bounds = array<i64: 8, 8>}]} {
    %c0_i32 = arith.constant 0 : i32
    %0 = arith.cmpi eq, %arg0, %c0_i32 : i32
    %1 = arith.extui %0 : i1 to i32
    %c0_i32_0 = arith.constant 0 : i32
    %2 = arith.cmpi ne, %1, %c0_i32_0 : i32
    scf.if %2 {
      %cst_10 = arith.constant 0.000000e+00 : f32
      %13 = vector.broadcast %cst_10 : f32 to vector<48x8xf32>
      %c0_11 = arith.constant 0 : index
      %c0_12 = arith.constant 0 : index
      %14 = vector.load %arg9[%c0_11, %c0_12] : memref<48x8xf32, #tpu.memory_space<vmem>>, vector<48x8xf32>
      tpu.vector_store %arg9[%c0_11, %c0_12], %13 {strides = array<i32>} : memref<48x8xf32, #tpu.memory_space<vmem>>, vector<48x8xf32>,
    } else {
    }
    %c0 = arith.constant 0 : index
    %c0_1 = arith.constant 0 : index
    %3 = vector.load %arg1[%c0, %c0_1] : memref<48x12xf32, #tpu.memory_space<vmem>>, vector<48x12xf32>
    %4 = arith.truncf %3 : vector<48x12xf32> to vector<48x12xbf16>
    %c0_2 = arith.constant 0 : index
    %c0_3 = arith.constant 0 : index
    %5 = vector.load %arg9[%c0_2, %c0_3] : memref<48x8xf32, #tpu.memory_space<vmem>>, vector<48x8xf32>
    %c0_4 = arith.constant 0 : index
    %c0_5 = arith.constant 0 : index
    %6 = vector.load %arg4[%c0_4, %c0_5] : memref<12x8xbf16, #tpu.memory_space<vmem>>, vector<12x8xbf16>
    %cst = arith.constant dense<0.000000e+00> : vector<48x8xf32>
    %7 = tpu.matmul %4, %6, %cst {dimension_numbers = #tpu.dot_dimension_numbers<[1], [0], [0], [1], [0, 0, 1, 1], [], []>} : vector<48x12xbf16>, vector<12x8xbf16>, vector<48x8xf32> -> vector<48x8xf32>
    %8 = arith.addf %5, %7 : vector<48x8xf32>
    %c0_6 = arith.constant 0 : index
    %c0_7 = arith.constant 0 : index
    %9 = vector.load %arg9[%c0_6, %c0_7] : memref<48x8xf32, #tpu.memory_space<vmem>>, vector<48x8xf32>
    tpu.vector_store %arg9[%c0_6, %c0_7], %8 {strides = array<i32>} : memref<48x8xf32, #tpu.memory_space<vmem>>, vector<48x8xf32>,
    %c0_i32_8 = arith.constant 0 : i32
    %10 = arith.cmpi eq, %arg0, %c0_i32_8 : i32
    %11 = arith.extui %10 : i1 to i32
    %c0_i32_9 = arith.constant 0 : i32
    %12 = arith.cmpi ne, %11, %c0_i32_9 : i32
    scf.if %12 {
      %c0_10 = arith.constant 0 : index
      %c0_11 = arith.constant 0 : index
      %13 = vector.load %arg3[%c0_10, %c0_11] : memref<8x16xf32, #tpu.memory_space<vmem>>, vector<8x16xf32>
      %c0_12 = arith.constant 0 : index
      %c0_13 = arith.constant 0 : index
      %14 = vector.load %arg9[%c0_12, %c0_13] : memref<48x8xf32, #tpu.memory_space<vmem>>, vector<16x8xf32>
      %cst_14 = arith.constant dense<0.000000e+00> : vector<8x8xf32>
      %15 = tpu.matmul %13, %14, %cst_14 {dimension_numbers = #tpu.dot_dimension_numbers<[1], [0], [0], [1], [0, 0, 1, 1], [], []>} : vector<8x16xf32>, vector<16x8xf32>, vector<8x8xf32> -> vector<8x8xf32>
      %cst_15 = arith.constant 1.000000e+00 : f32
      %16 = vector.broadcast %cst_15 : f32 to vector<8x8xf32>
      %17 = arith.subf %15, %16 : vector<8x8xf32>
      %c0_16 = arith.constant 0 : index
      %c0_17 = arith.constant 0 : index
      %c0_18 = arith.constant 0 : index
      %18 = vector.load %arg7[%c0_16, %c0_17, %c0_18] : memref<3x8x8xf32, #tpu.memory_space<vmem>>, vector<1x8x8xf32>
      %19 = vector.shape_cast %18 : vector<1x8x8xf32> to vector<8x8xf32>
      %20 = vector.shape_cast %17 : vector<8x8xf32> to vector<1x8x8xf32>
      tpu.vector_store %arg7[%c0_16, %c0_17, %c0_18], %20 {strides = array<i32>} : memref<3x8x8xf32, #tpu.memory_space<vmem>>, vector<1x8x8xf32>,
      %c16 = arith.constant 16 : index
      %c0_19 = arith.constant 0 : index
      %21 = vector.load %arg9[%c16, %c0_19] : memref<48x8xf32, #tpu.memory_space<vmem>>, vector<16x8xf32>
      %cst_20 = arith.constant dense<0.000000e+00> : vector<8x8xf32>
      %22 = tpu.matmul %13, %21, %cst_20 {dimension_numbers = #tpu.dot_dimension_numbers<[1], [0], [0], [1], [0, 0, 1, 1], [], []>} : vector<8x16xf32>, vector<16x8xf32>, vector<8x8xf32> -> vector<8x8xf32>
      %cst_21 = arith.constant 1.000000e+00 : f32
      %23 = vector.broadcast %cst_21 : f32 to vector<8x8xf32>
      %24 = arith.subf %22, %23 : vector<8x8xf32>
      %c1 = arith.constant 1 : index
      %c0_22 = arith.constant 0 : index
      %c0_23 = arith.constant 0 : index
      %25 = vector.load %arg7[%c1, %c0_22, %c0_23] : memref<3x8x8xf32, #tpu.memory_space<vmem>>, vector<1x8x8xf32>
      %26 = vector.shape_cast %25 : vector<1x8x8xf32> to vector<8x8xf32>
      %27 = vector.shape_cast %24 : vector<8x8xf32> to vector<1x8x8xf32>
      tpu.vector_store %arg7[%c1, %c0_22, %c0_23], %27 {strides = array<i32>} : memref<3x8x8xf32, #tpu.memory_space<vmem>>, vector<1x8x8xf32>,
      %c32 = arith.constant 32 : index
      %c0_24 = arith.constant 0 : index
      %28 = vector.load %arg9[%c32, %c0_24] : memref<48x8xf32, #tpu.memory_space<vmem>>, vector<16x8xf32>
      %cst_25 = arith.constant dense<0.000000e+00> : vector<8x8xf32>
      %29 = tpu.matmul %13, %28, %cst_25 {dimension_numbers = #tpu.dot_dimension_numbers<[1], [0], [0], [1], [0, 0, 1, 1], [], []>} : vector<8x16xf32>, vector<16x8xf32>, vector<8x8xf32> -> vector<8x8xf32>
      %cst_26 = arith.constant 1.000000e+00 : f32
      %30 = vector.broadcast %cst_26 : f32 to vector<8x8xf32>
      %31 = arith.subf %29, %30 : vector<8x8xf32>
      %c2 = arith.constant 2 : index
      %c0_27 = arith.constant 0 : index
      %c0_28 = arith.constant 0 : index
      %32 = vector.load %arg7[%c2, %c0_27, %c0_28] : memref<3x8x8xf32, #tpu.memory_space<vmem>>, vector<1x8x8xf32>
      %33 = vector.shape_cast %32 : vector<1x8x8xf32> to vector<8x8xf32>
      %34 = vector.shape_cast %31 : vector<8x8xf32> to vector<1x8x8xf32>
      tpu.vector_store %arg7[%c2, %c0_27, %c0_28], %34 {strides = array<i32>} : memref<3x8x8xf32, #tpu.memory_space<vmem>>, vector<1x8x8xf32>,
      %c0_29 = arith.constant 0 : index
      %c0_30 = arith.constant 0 : index
      %35 = vector.load %arg2[%c0_29, %c0_30] : memref<16x12xf32, #tpu.memory_space<vmem>>, vector<16x12xf32>
      %36 = arith.truncf %35 : vector<16x12xf32> to vector<16x12xbf16>
      %c0_31 = arith.constant 0 : index
      %c0_32 = arith.constant 0 : index
      %37 = vector.load %arg6[%c0_31, %c0_32] : memref<12x8xbf16, #tpu.memory_space<vmem>>, vector<12x8xbf16>
      %cst_33 = arith.constant dense<0.000000e+00> : vector<16x8xf32>
      %38 = tpu.matmul %36, %37, %cst_33 {dimension_numbers = #tpu.dot_dimension_numbers<[1], [0], [0], [1], [0, 0, 1, 1], [], []>} : vector<16x12xbf16>, vector<12x8xbf16>, vector<16x8xf32> -> vector<16x8xf32>
      %c0_34 = arith.constant 0 : index
      %c0_35 = arith.constant 0 : index
      %39 = vector.load %arg5[%c0_34, %c0_35] : memref<8x16xf32, #tpu.memory_space<vmem>>, vector<8x16xf32>
      %cst_36 = arith.constant dense<0.000000e+00> : vector<8x8xf32>
      %40 = tpu.matmul %39, %38, %cst_36 {dimension_numbers = #tpu.dot_dimension_numbers<[1], [0], [0], [1], [0, 0, 1, 1], [], []>} : vector<8x16xf32>, vector<16x8xf32>, vector<8x8xf32> -> vector<8x8xf32>
      %c0_37 = arith.constant 0 : index
      %c0_38 = arith.constant 0 : index
      %41 = vector.load %arg8[%c0_37, %c0_38] : memref<8x8xf32, #tpu.memory_space<vmem>>, vector<8x8xf32>
      tpu.vector_store %arg8[%c0_37, %c0_38], %40 {strides = array<i32>} : memref<8x8xf32, #tpu.memory_space<vmem>>, vector<8x8xf32>,
    } else {
    }
    return
  }
  func.func @transform_0(%arg0: i32) -> (i32, i32) {
    %c0_i32 = arith.constant 0 : i32
    %c0_i32_0 = arith.constant 0 : i32
    return %c0_i32, %arg0 : i32, i32
  }
  func.func @transform_1(%arg0: i32) -> (i32, i32) {
    %c0_i32 = arith.constant 0 : i32
    %c0_i32_0 = arith.constant 0 : i32
    %c0_i32_1 = arith.constant 0 : i32
    return %c0_i32, %c0_i32_0 : i32, i32
  }
  func.func @transform_2(%arg0: i32) -> (i32, i32) {
    %c0_i32 = arith.constant 0 : i32
    %c0_i32_0 = arith.constant 0 : i32
    %c0_i32_1 = arith.constant 0 : i32
    return %c0_i32, %c0_i32_0 : i32, i32
  }
  func.func @transform_3(%arg0: i32) -> (i32, i32) {
    %c0_i32 = arith.constant 0 : i32
    %c0_i32_0 = arith.constant 0 : i32
    return %arg0, %c0_i32 : i32, i32
  }
  func.func @transform_4(%arg0: i32) -> (i32, i32) {
    %c0_i32 = arith.constant 0 : i32
    %c0_i32_0 = arith.constant 0 : i32
    %c0_i32_1 = arith.constant 0 : i32
    return %c0_i32, %c0_i32_0 : i32, i32
  }
  func.func @transform_5(%arg0: i32) -> (i32, i32) {
    %c0_i32 = arith.constant 0 : i32
    %c0_i32_0 = arith.constant 0 : i32
    %c0_i32_1 = arith.constant 0 : i32
    return %c0_i32, %c0_i32_0 : i32, i32
  }
  func.func @transform_6(%arg0: i32) -> (i32, i32, i32) {
    %c0_i32 = arith.constant 0 : i32
    %c0_i32_0 = arith.constant 0 : i32
    %c0_i32_1 = arith.constant 0 : i32
    %c0_i32_2 = arith.constant 0 : i32
    return %c0_i32, %c0_i32_0, %c0_i32_1 : i32, i32, i32
  }
  func.func @transform_7(%arg0: i32) -> (i32, i32) {
    %c0_i32 = arith.constant 0 : i32
    %c0_i32_0 = arith.constant 0 : i32
    %c0_i32_1 = arith.constant 0 : i32
    return %c0_i32, %c0_i32_0 : i32, i32
  }
}

</mosaic_0001>

<llo_original>
// kernel: tpu_custom_call.1
$region0: #{tpu_custom_call.1}
  #allocation0 [shape = 'u32[]', space=smem, size = 0x4, offset = 0x4, fixed_abs, tag = 'smem constant byte address 0x4 - core index']
  #allocation1 [shape = 'u32[72,128]{1,0:T(1,128)}', space=vmem, size = 0x9000, scoped, tag = 'internal scratch']
  #allocation2 [shape = 'f32[48,8]{1,0:T(8,128)}', space=vmem, size = 0x6000, scoped, tag = 'scratch operand']
  %s0 = inlined_call_operand.vmem [shape: f32[48,12], index: 0, kind: input, shape index: {}]
  %s1 = inlined_call_operand.vmem [shape: f32[16,12], index: 1, kind: input, shape index: {}]
  %s2 = inlined_call_operand.vmem [shape: f32[8,16], index: 2, kind: input, shape index: {}]
  %s3 = inlined_call_operand.vmem [shape: bf16[12,8], index: 3, kind: input, shape index: {}]
  %s4 = inlined_call_operand.vmem [shape: f32[8,16], index: 4, kind: input, shape index: {}]
  %s5 = inlined_call_operand.vmem [shape: bf16[12,8], index: 5, kind: input, shape index: {}]
  %s6 = inlined_call_operand.hbm [shape: f32[3,8,8], index: 6, kind: output, shape index: {0}]
  %s7 = inlined_call_operand.hbm [shape: f32[8,8], index: 7, kind: output, shape index: {1}]
  %8 = xla_tuple %s6, %s7
  %s9 = sld [smem:[#allocation0]]
  $region50: #{tpu_custom_call.1} parent=0
    _
  %s11 = ssub.s32 1, %s9
  %s12 = scalar_select 0, %s11, %s9
  $region1: #{tpu_custom_call.1} parent=0
    #allocation3 [shape = 'u8[12288]{0}', space=vmem, size = 0x3000, scoped, tag = 'output window, operand 0, single buffered']
    #allocation4 [shape = 's32[1]{0}', space=sflag, size = 0x4, scoped, tag = 'scoped memory for tpu_custom_call.1']
    #allocation5 [shape = 'u8[4096]{0}', space=vmem, size = 0x1000, scoped, tag = 'output window, operand 1, single buffered']
    #allocation6 [shape = 's32[1]{0}', space=sflag, size = 0x4, scoped, tag = 'scoped memory for tpu_custom_call.1']
    %13 = vsyncpa [#allocation4], 0
    %14 = vsyncpa [#allocation6], 0
    // Predicated region
    $region2: #{tpu_custom_call.1} parent=1 // pred_check
      _
    $region3: #{tpu_custom_call.1} parent=1 // pred_check_branch
      %16 = sbr.rel (0) target = $region5
    $region4: #{tpu_custom_call.1} parent=1 // pred_region
      _
    $region5: #{tpu_custom_call.1} parent=1 // pred_fallthru
      _
    // Predicated region
    $region6: #{tpu_custom_call.1} parent=1 // pred_check
      _
    $region7: #{tpu_custom_call.1} parent=1 // pred_check_branch
      %18 = sbr.rel (0) target = $region9
    $region8: #{tpu_custom_call.1} parent=1 // pred_region
      _
    $region9: #{tpu_custom_call.1} parent=1 // pred_fallthru
      _
    // Predicated region
    $region10: #{tpu_custom_call.1} parent=1 // pred_check
      _
    $region11: #{tpu_custom_call.1} parent=1 // pred_check_branch
      %20 = sbr.rel (0) target = $region13
    $region12: #{tpu_custom_call.1} parent=1 // pred_region
      _
    $region13: #{tpu_custom_call.1} parent=1 // pred_fallthru
      _
    // Predicated region
    $region14: #{tpu_custom_call.1} parent=1 // pred_check
      _
    $region15: #{tpu_custom_call.1} parent=1 // pred_check_branch
      %22 = sbr.rel (0) target = $region17
    $region16: #{tpu_custom_call.1} parent=1 // pred_region
      _
    $region17: #{tpu_custom_call.1} parent=1 // pred_fallthru
      _
    // Predicated region
    $region18: #{tpu_custom_call.1} parent=1 // pred_check
      _
    $region19: #{tpu_custom_call.1} parent=1 // pred_check_branch
      %24 = sbr.rel (0) target = $region21
    $region20: #{tpu_custom_call.1} parent=1 // pred_region
      _
    $region21: #{tpu_custom_call.1} parent=1 // pred_fallthru
      _
    // Predicated region
    $region22: #{tpu_custom_call.1} parent=1 // pred_check
      _
    $region23: #{tpu_custom_call.1} parent=1 // pred_check_branch
      %26 = sbr.rel (0) target = $region25
    $region24: #{tpu_custom_call.1} parent=1 // pred_region
      _
    $region25: #{tpu_custom_call.1} parent=1 // pred_fallthru
      _
    %p28 = scmp.eq.s32.totalorder 0, 0
    // Predicated region
    $region26: #{tpu_custom_call.1} parent=1 // pred_check
      %p29 = pneg %p28
    $region27: #{tpu_custom_call.1} parent=1 // pred_check_branch
      %31 = sbr.rel (%p29) target = $region29
    $region28: #{tpu_custom_call.1} parent=1 // pred_region
      %vm32 = vcmask 64512
      %33 = vst.msk [vmem:[#allocation2] sm:$0xff] %vm32, 0.0
      %34 = vst.msk [vmem:[#allocation2 + $0x8] sm:$0xff] %vm32, 0.0
      %35 = vst.msk [vmem:[#allocation2 + $0x10] sm:$0xff] %vm32, 0.0
      %36 = vst.msk [vmem:[#allocation2 + $0x18] sm:$0xff] %vm32, 0.0
      %37 = vst.msk [vmem:[#allocation2 + $0x20] sm:$0xff] %vm32, 0.0
      %38 = vst.msk [vmem:[#allocation2 + $0x28] sm:$0xff] %vm32, 0.0
    $region29: #{tpu_custom_call.1} parent=1 // pred_fallthru
      _
    %v39 = vld [vmem:[%s0] sm:$0xff]
    %v40 = vld [vmem:[%s0 + $0x8] sm:$0xff]
    %v41 = vld [vmem:[%s0 + $0x10] sm:$0xff]
    %v42 = vld [vmem:[%s0 + $0x18] sm:$0xff]
    %v43 = vld [vmem:[%s0 + $0x20] sm:$0xff]
    %v44 = vld [vmem:[%s0 + $0x28] sm:$0xff]
    %v45 = vpack.c.bf16 %v40, %v39
    %v46 = vpack.c.bf16 %v42, %v41
    %v47 = vpack.c.bf16 %v44, %v43
    %v48 = vld [vmem:[#allocation2] sm:$0xff]
    %v49 = vld [vmem:[#allocation2 + $0x8] sm:$0xff]
    %v50 = vld [vmem:[#allocation2 + $0x10] sm:$0xff]
    %v51 = vld [vmem:[#allocation2 + $0x18] sm:$0xff]
    %v52 = vld [vmem:[#allocation2 + $0x20] sm:$0xff]
    %v53 = vld [vmem:[#allocation2 + $0x28] sm:$0xff]
    %v54 = vld [vmem:[%s3] sm:$0xf]
    %v55 = vld [vmem:[%s3 + $0x4] sm:$0x3]
    %v58 = vunpack.c.l.b16 %v54
    %v59 = vunpack.c.l.b16 %v55
    %v60 = vpack.c.b16 %v59, %v58
    %vm61 = vcmask 97280
    %v63 = vsel %vm61, %v45, 0
    %v66 = vsel %vm61, %v46, 0
    %v69 = vsel %vm61, %v47, 0
    %vm71 = vcmask 1045504
    %v73 = vsel %vm71, %v60, 0
    %75 = vmatpush.bf16.msra.mxu0 0
    %76 = vmatpush.bf16.msra.mxu0 0
    %77 = vmatpush.bf16.msra.mxu0 0
    %78 = vmatpush.bf16.msra.mxu0 0
    %79 = vmatpush.bf16.msra.mxu0 0
    %80 = vmatpush.bf16.msra.mxu0 0
    %81 = vmatpush.bf16.msra.mxu0 0
    %82 = vmatpush.bf16.msra.mxu0 %v73
    %83 = vmatmul.bf16.gmra.mxu0 %v63
    %v84 = vpop.f32.mrf.mxu0
    %v85 = vadd.f32 0.0, %v84
    %v86 = vpop.f32.mrf.mxu0
    %v87 = vadd.f32 0.0, %v86
    %88 = vmatmul.bf16.gmra.mxu0 %v66
    %v89 = vpop.f32.mrf.mxu0
    %v90 = vadd.f32 0.0, %v89
    %v91 = vpop.f32.mrf.mxu0
    %v92 = vadd.f32 0.0, %v91
    %93 = vmatmul.bf16.gmra.mxu0 %v69
    %v94 = vpop.f32.mrf.mxu0
    %v95 = vadd.f32 0.0, %v94
    %v96 = vpop.f32.mrf.mxu0
    %v97 = vadd.f32 0.0, %v96
    %98 = vdwg.mxu0
    %v99 = vadd.f32 %v48, %v85
    %v100 = vadd.f32 %v49, %v87
    %v101 = vadd.f32 %v50, %v90
    %v102 = vadd.f32 %v51, %v92
    %v103 = vadd.f32 %v52, %v95
    %v104 = vadd.f32 %v53, %v97
    %vm105 = vcmask 64512
    %106 = vst.msk [vmem:[#allocation2] sm:$0xff] %vm105, %v99
    %107 = vst.msk [vmem:[#allocation2 + $0x8] sm:$0xff] %vm105, %v100
    %108 = vst.msk [vmem:[#allocation2 + $0x10] sm:$0xff] %vm105, %v101
    %109 = vst.msk [vmem:[#allocation2 + $0x18] sm:$0xff] %vm105, %v102
    %110 = vst.msk [vmem:[#allocation2 + $0x20] sm:$0xff] %vm105, %v103
    %111 = vst.msk [vmem:[#allocation2 + $0x28] sm:$0xff] %vm105, %v104
    // Predicated region
    $region30: #{tpu_custom_call.1} parent=1 // pred_check
      %p112 = pneg %p28
    $region31: #{tpu_custom_call.1} parent=1 // pred_check_branch
      %114 = sbr.rel (%p112) target = $region33
    $region32: #{tpu_custom_call.1} parent=1 // pred_region
      %v115 = vld [vmem:[%s2] sm:$0xff]
      %v116 = vld [vmem:[#allocation2] sm:$0xff]
      %v117 = vld [vmem:[#allocation2 + $0x8] sm:$0xff]
      %vm118 = vcmask 130048
      %v120 = vsel %vm118, %v115, 0
      %122 = vmatpush.msra.mxu0 0.0
      %123 = vmatpush.msra.mxu0 0.0
      %124 = vmatpush.msra.mxu0 0.0
      %125 = vmatpush.msra.mxu0 0.0
      %126 = vmatpush.msra.mxu0 0.0
      %127 = vmatpush.msra.mxu0 0.0
      %128 = vmatpush.msra.mxu0 0.0
      %129 = vmatpush.msra.mxu0 0.0
      %130 = vmatpush.msra.mxu0 0.0
      %131 = vmatpush.msra.mxu0 0.0
      %132 = vmatpush.msra.mxu0 0.0
      %133 = vmatpush.msra.mxu0 0.0
      %134 = vmatpush.msra.mxu0 0.0
      %135 = vmatpush.msra.mxu0 0.0
      %136 = vmatpush.msra.mxu0 %v117
      %137 = vmatpush.msra.mxu0 %v116
      %138 = vmatmul.f32.gmra.mxu0 %v120
      %v139 = vpop.f32.mrf.mxu0
      %v140 = vadd.f32 0.0, %v139
      %141 = vdwg.mxu0
      %v142 = vsub.f32 %v140, 1.0
      %143 = vst.msk [vmem:[#allocation3] sm:$0xff] %vm105, %v142
      %v144 = vld [vmem:[#allocation2 + $0x10] sm:$0xff]
      %v145 = vld [vmem:[#allocation2 + $0x18] sm:$0xff]
      %146 = vmatpush.msra.mxu0 0.0
      %147 = vmatpush.msra.mxu0 0.0
      %148 = vmatpush.msra.mxu0 0.0
      %149 = vmatpush.msra.mxu0 0.0
      %150 = vmatpush.msra.mxu0 0.0
      %151 = vmatpush.msra.mxu0 0.0
      %152 = vmatpush.msra.mxu0 0.0
      %153 = vmatpush.msra.mxu0 0.0
      %154 = vmatpush.msra.mxu0 0.0
      %155 = vmatpush.msra.mxu0 0.0
      %156 = vmatpush.msra.mxu0 0.0
      %157 = vmatpush.msra.mxu0 0.0
      %158 = vmatpush.msra.mxu0 0.0
      %159 = vmatpush.msra.mxu0 0.0
      %160 = vmatpush.msra.mxu0 %v145
      %161 = vmatpush.msra.mxu0 %v144
      %162 = vmatmul.f32.gmra.mxu0 %v120
      %v163 = vpop.f32.mrf.mxu0
      %v164 = vadd.f32 0.0, %v163
      %165 = vdwg.mxu0
      %v166 = vsub.f32 %v164, 1.0
      %s167 = scalar_lea.vmem [#allocation3], 8
      %168 = vst.msk [vmem:[%s167] sm:$0xff] %vm105, %v166
      %v169 = vld [vmem:[#allocation2 + $0x20] sm:$0xff]
      %v170 = vld [vmem:[#allocation2 + $0x28] sm:$0xff]
      %171 = vmatpush.msra.mxu0 0.0
      %172 = vmatpush.msra.mxu0 0.0
      %173 = vmatpush.msra.mxu0 0.0
      %174 = vmatpush.msra.mxu0 0.0
      %175 = vmatpush.msra.mxu0 0.0
      %176 = vmatpush.msra.mxu0 0.0
      %177 = vmatpush.msra.mxu0 0.0
      %178 = vmatpush.msra.mxu0 0.0
      %179 = vmatpush.msra.mxu0 0.0
      %180 = vmatpush.msra.mxu0 0.0
      %181 = vmatpush.msra.mxu0 0.0
      %182 = vmatpush.msra.mxu0 0.0
      %183 = vmatpush.msra.mxu0 0.0
      %184 = vmatpush.msra.mxu0 0.0
      %185 = vmatpush.msra.mxu0 %v170
      %186 = vmatpush.msra.mxu0 %v169
      %187 = vmatmul.f32.gmra.mxu0 %v120
      %v188 = vpop.f32.mrf.mxu0
      %v189 = vadd.f32 0.0, %v188
      %190 = vdwg.mxu0
      %v191 = vsub.f32 %v189, 1.0
      %s192 = scalar_lea.vmem [#allocation3], 16
      %193 = vst.msk [vmem:[%s192] sm:$0xff] %vm105, %v191
      %v194 = vld [vmem:[%s1] sm:$0xff]
      %v195 = vld [vmem:[%s1 + $0x8] sm:$0xff]
      %v196 = vpack.c.bf16 %v195, %v194
      %v197 = vld [vmem:[%s5] sm:$0xf]
      %v198 = vld [vmem:[%s5 + $0x4] sm:$0x3]
      %v201 = vunpack.c.l.b16 %v197
      %v202 = vunpack.c.l.b16 %v198
      %v203 = vpack.c.b16 %v202, %v201
      %v205 = vsel %vm61, %v196, 0
      %v208 = vsel %vm71, %v203, 0
      %210 = vmatpush.bf16.msra.mxu0 0
      %211 = vmatpush.bf16.msra.mxu0 0
      %212 = vmatpush.bf16.msra.mxu0 0
      %213 = vmatpush.bf16.msra.mxu0 0
      %214 = vmatpush.bf16.msra.mxu0 0
      %215 = vmatpush.bf16.msra.mxu0 0
      %216 = vmatpush.bf16.msra.mxu0 0
      %217 = vmatpush.bf16.msra.mxu0 %v208
      %218 = vmatmul.bf16.gmra.mxu0 %v205
      %v219 = vpop.f32.mrf.mxu0
      %v220 = vadd.f32 0.0, %v219
      %v221 = vpop.f32.mrf.mxu0
      %v222 = vadd.f32 0.0, %v221
      %223 = vdwg.mxu0
      %v224 = vld [vmem:[%s4] sm:$0xff]
      %v226 = vsel %vm118, %v224, 0
      %228 = vmatpush.msra.mxu0 0.0
      %229 = vmatpush.msra.mxu0 0.0
      %230 = vmatpush.msra.mxu0 0.0
      %231 = vmatpush.msra.mxu0 0.0
      %232 = vmatpush.msra.mxu0 0.0
      %233 = vmatpush.msra.mxu0 0.0
      %234 = vmatpush.msra.mxu0 0.0
      %235 = vmatpush.msra.mxu0 0.0
      %236 = vmatpush.msra.mxu0 0.0
      %237 = vmatpush.msra.mxu0 0.0
      %238 = vmatpush.msra.mxu0 0.0
      %239 = vmatpush.msra.mxu0 0.0
      %240 = vmatpush.msra.mxu0 0.0
      %241 = vmatpush.msra.mxu0 0.0
      %242 = vmatpush.msra.mxu0 %v222
      %243 = vmatpush.msra.mxu0 %v220
      %244 = vmatmul.f32.gmra.mxu0 %v226
      %v245 = vpop.f32.mrf.mxu0
      %v246 = vadd.f32 0.0, %v245
      %247 = vdwg.mxu0
      %248 = vst.msk [vmem:[#allocation5] sm:$0xff] %vm105, %v246
    $region33: #{tpu_custom_call.1} parent=1 // pred_fallthru
      _
    // Predicated region
    $region34: #{tpu_custom_call.1} parent=1 // pred_check
      _
    $region35: #{tpu_custom_call.1} parent=1 // pred_check_branch
      %250 = sbr.rel (0) target = $region37
    $region36: #{tpu_custom_call.1} parent=1 // pred_region
      %252 = vsyncadd [#allocation4], 0
      %s253 = sshll.u32 [#allocation3], 4
      %s254 = int_to_ptr.vmem [resolvable:$true] %s253
      %s255 = sshll.u32 %s6, 4
      %s256 = int_to_ptr.hbm [resolvable:$true] %s255
      %261 = dma.vmem_to_hbm [thread:$0]  %s254, 384, %s256, [#allocation4], 128, 128, 8
    $region37: #{tpu_custom_call.1} parent=1 // pred_fallthru
      _
    // Predicated region
    $region38: #{tpu_custom_call.1} parent=1 // pred_check
      _
    $region39: #{tpu_custom_call.1} parent=1 // pred_check_branch
      %263 = sbr.rel (0) target = $region41
    $region40: #{tpu_custom_call.1} parent=1 // pred_region
      %265 = vsyncadd [#allocation6], 0
      %s267 = sshll.u32 [#allocation5], 4
      %s268 = int_to_ptr.vmem [resolvable:$true] %s267
      %s269 = sshll.u32 %s7, 4
      %s270 = int_to_ptr.hbm [resolvable:$true] %s269
      %272 = dma.vmem_to_hbm [thread:$0]  %s268, 128, %s270, [#allocation6]
    $region41: #{tpu_custom_call.1} parent=1 // pred_fallthru
      _
    // Predicated region
    $region42: #{tpu_custom_call.1} parent=1 // pred_check
      _
    $region43: #{tpu_custom_call.1} parent=1 // pred_check_branch
      %274 = sbr.rel (0) target = $region45
    $region44: #{tpu_custom_call.1} parent=1 // pred_region
      %276 = dma.done [#allocation4], 384
    $region45: #{tpu_custom_call.1} parent=1 // pred_fallthru
      _
    // Predicated region
    $region46: #{tpu_custom_call.1} parent=1 // pred_check
      _
    $region47: #{tpu_custom_call.1} parent=1 // pred_check_branch
      %278 = sbr.rel (0) target = $region49
    $region48: #{tpu_custom_call.1} parent=1 // pred_region
      %280 = dma.done [#allocation6], 128
    $region49: #{tpu_custom_call.1} parent=1 // pred_fallthru
      _
    %281 = vsyncpa [#allocation4], 1
    %282 = vsyncpa [#allocation6], 1

</llo_original>
